<compile_context>
chip_gen: v6e
topology: v6e:2x2x1
jax: 0.10.0
libtpu: 0.0.40
codegen_flags: <defaults>
</compile_context>

<pallas_src>
import functools

import jax
import jax.numpy as jnp
from jax.experimental import pallas as pl
from jax.experimental.pallas import tpu as pltpu


def _pick_row_block(Hp, B, C, P, W, itemsize, *, max_block_bytes=4 << 20,
                    min_steps=4):
    """Largest divisor RH of Hp such that the x band fits comfortably in VMEM
    and the grid still has enough steps for pipelining / megacore sharding."""
    best_fit, best_ok = 1, None
    for rh in range(1, Hp + 1):
        if Hp % rh:
            continue
        if C * rh * P * W * itemsize > max_block_bytes:
            continue
        best_fit = rh
        if B * (Hp // rh) >= min_steps:
            best_ok = rh
    return best_ok if best_ok is not None else best_fit


def _patch_embed_kernel(x_ref, w_ref, o_ref, tbuf_ref, lhs_ref, *,
                        C, RH, P, W, Wp, compute_dtype):
    """One grid step = RH patch rows of one image.

    x_ref:    (C, RH, P, W)  contiguous row band of the input image
    w_ref:    (K, E)         resident weight, K flattened in (pw, c, ph) order
    o_ref:    (RH, Wp, E)    output embeddings for this band
    tbuf_ref: (W, C*P)       scratch: transposed band for one patch row
    lhs_ref:  (Wp, K)        scratch: gathered full-K lhs for one patch row
    """
    CP = C * P
    for rh in range(RH):                                   # static unroll
        # Move W onto sublanes so the pw-deinterleave below is a cheap
        # sublane-strided VMEM read.  Small 2-D XLU transposes overlap the
        # MXU matmul (different VLIW slots).
        for c in range(C):                                  # static unroll
            tbuf_ref[:, pl.ds(c * P, P)] = x_ref[c, rh, :, :].T   # (W, P)
        # Deinterleave pw: rows pw, pw+P, pw+2P, ... of tbuf are the patches'
        # pw-th column; lay them side by side -> lhs[wi, pw*CP + c*P + ph].
        for pw in range(P):                                 # static unroll
            lhs_ref[:, pl.ds(pw * CP, CP)] = tbuf_ref[pl.ds(pw, Wp, stride=P), :]
        # One full-K matmul per patch row; bf16 operands, f32 accumulation.
        lhs = lhs_ref[...].astype(compute_dtype)            # (Wp, K)
        o_ref[rh] = jnp.dot(
            lhs, w_ref[...], preferred_element_type=jnp.float32
        ).astype(o_ref.dtype)


def patch_embedding_forward(x, weight, patch_size, *,
                            compute_dtype=jnp.bfloat16, out_dtype=None):
    """x: (B, C, H, W); weight: (E, C, P, P) (torch Conv2d layout, bias=False).

    Returns (patches, size): patches (B, N, E) with N = (H/P)*(W/P), size (H, W).
    """
    B, C, H, W = x.shape
    E = weight.shape[0]
    P = patch_size
    assert H % P == 0 and W % P == 0, "image size must be divisible by patch_size"
    Hp, Wp = H // P, W // P
    N = Hp * Wp
    K = C * P * P
    out_dtype = out_dtype or x.dtype

    # Free, contiguous reshape (no HBM data movement): exposes the patch-row
    # structure so each grid step DMAs a fully contiguous band of x.
    x5 = x.reshape(B, C, Hp, P, W)

    # Parameter-side relayout: K flattened in (pw, c, ph) order to match the
    # in-kernel deinterleave.  TODO(synk): precompute once at module init.
    wm = jnp.transpose(weight, (3, 1, 2, 0)).reshape(K, E).astype(compute_dtype)

    RH = _pick_row_block(Hp, B, C, P, W, jnp.dtype(x.dtype).itemsize)
    grid = (B, Hp // RH)

    kernel = functools.partial(
        _patch_embed_kernel, C=C, RH=RH, P=P, W=W, Wp=Wp,
        compute_dtype=compute_dtype)

    cost = pl.CostEstimate(
        flops=2 * B * N * K * E,
        transcendentals=0,
        bytes_accessed=(x.size * x.dtype.itemsize
                        + K * E * jnp.dtype(compute_dtype).itemsize
                        + B * N * E * jnp.dtype(out_dtype).itemsize),
    )

    out = pl.pallas_call(
        kernel,
        out_shape=jax.ShapeDtypeStruct((B, Hp, Wp, E), out_dtype),
        grid_spec=pltpu.PrefetchScalarGridSpec(
            num_scalar_prefetch=0,
            grid=grid,
            in_specs=[
                # Contiguous (C, RH, P, W) band of one image; trailing block
                # dims equal the full array dims -> no padding, dense DMAs.
                pl.BlockSpec((None, C, RH, P, W), lambda b, r: (b, 0, r, 0, 0)),
                # Whole weight resident in VMEM: a single copy, not a
                # double-buffered pipeline operand.
                pl.BlockSpec(memory_space=pltpu.MemorySpace.VMEM),
            ],
            out_specs=pl.BlockSpec((None, RH, Wp, E), lambda b, r: (b, r, 0, 0)),
            scratch_shapes=[
                pltpu.VMEM((W, C * P), x.dtype),   # transposed band
                pltpu.VMEM((Wp, K), x.dtype),      # gathered full-K lhs
            ],
        ),
        compiler_params=pltpu.CompilerParams(
            # Both axes independent -> megacore sharding on v7x and pipelined
            # double-buffered band DMAs everywhere.
            dimension_semantics=("parallel", "parallel"),
        ),
        cost_estimate=cost,
    )(x5, wm)

    # (B, Hp, Wp, E) -> (B, N, E) is a free contiguous reshape (no slice copy).
    patches = out.reshape(B, N, E)
    return patches, (H, W)


if __name__ == "__main__":
    # Small shapes consistent with the module.
    B, C, H, W = 2, 4, 16, 16
    P = 4
    E = P * P * C  # embed_dim default = patch_size**2 * in_channels = 64

    key = jax.random.PRNGKey(0)
    kx, kw = jax.random.split(key)
    x = jax.random.normal(kx, (B, C, H, W), dtype=jnp.float32)
    # torch Conv2d weight layout: (E, C, P, P), bias=False.
    weight = jax.random.normal(kw, (E, C, P, P), dtype=jnp.float32) * 0.05

    # Reference: a real strided conv (same semantics as nn.Conv2d, bias=False).
    ref_conv = jax.lax.conv_general_dilated(
        x, weight, window_strides=(P, P), padding="VALID",
        dimension_numbers=("NCHW", "OIHW", "NCHW"),
        precision=jax.lax.Precision.HIGHEST,
    )                                                            # (B, E, Hp, Wp)
    ref = jnp.transpose(ref_conv.reshape(B, E, -1), (0, 2, 1))   # (B, N, E)

    # Default path: bf16 MXU operands, f32 accumulation (recommended on
    # v5e/v6e/v7x).
    patches, size = patch_embedding_forward(x, weight, P)
    patches = jax.block_until_ready(patches)
    assert patches.shape == (B, (H // P) * (W // P), E)
    assert size == (H, W)
    assert jnp.allclose(patches, ref, atol=5e-2, rtol=5e-2)

    # f32 compute path: tight agreement with the conv reference.
    patches_f32, _ = patch_embedding_forward(
        x, weight, P, compute_dtype=jnp.float32)
    patches_f32 = jax.block_until_ready(patches_f32)
    assert jnp.allclose(patches_f32, ref, atol=2e-3, rtol=2e-3)

    print("KERNEL_OK")
</pallas_src>

<mosaic_0001>
module attributes {stable_mosaic.version = 11 : i64} {
  func.func @_patch_embed_kernel(%arg0: i32, %arg1: i32, %arg2: memref<1x4x2x4x16xf32, #tpu.memory_space<vmem>>, %arg3: memref<64x64xbf16, #tpu.memory_space<vmem>>, %arg4: memref<1x2x4x64xf32, #tpu.memory_space<vmem>>, %arg5: memref<16x16xf32, #tpu.memory_space<vmem>>, %arg6: memref<4x64xf32, #tpu.memory_space<vmem>>) attributes {dimension_semantics = [#tpu.dimension_semantics<parallel>, #tpu.dimension_semantics<parallel>], iteration_bounds = array<i64: 2, 2>, scalar_prefetch = 0 : i64, scratch_operands = 2 : i64, tpu.core_type = #tpu.core_type<tc>, window_params = [{transform_indices = @transform_0, window_bounds = array<i64: 1, 4, 2, 4, 16>}, {pipeline_mode = #tpu.pipeline_mode<synchronous>, transform_indices = @transform_1, window_bounds = array<i64: 64, 64>}, {transform_indices = @transform_2, window_bounds = array<i64: 1, 2, 4, 64>}]} {
    %c0 = arith.constant 0 : index
    %c0_0 = arith.constant 0 : index
    %c0_1 = arith.constant 0 : index
    %c0_2 = arith.constant 0 : index
    %c0_3 = arith.constant 0 : index
    %0 = vector.load %arg2[%c0, %c0_0, %c0_1, %c0_2, %c0_3] : memref<1x4x2x4x16xf32, #tpu.memory_space<vmem>>, vector<1x1x1x4x16xf32>
    %1 = vector.shape_cast %0 : vector<1x1x1x4x16xf32> to vector<4x16xf32>
    %2 = tpu.transpose %1, [1, 0] : vector<4x16xf32> -> vector<16x4xf32>
    %c0_4 = arith.constant 0 : index
    %c0_5 = arith.constant 0 : index
    %3 = vector.load %arg5[%c0_4, %c0_5] : memref<16x16xf32, #tpu.memory_space<vmem>>, vector<16x4xf32>
    tpu.vector_store %arg5[%c0_4, %c0_5], %2 {strides = array<i32>} : memref<16x16xf32, #tpu.memory_space<vmem>>, vector<16x4xf32>,
    %c0_6 = arith.constant 0 : index
    %c1 = arith.constant 1 : index
    %c0_7 = arith.constant 0 : index
    %c0_8 = arith.constant 0 : index
    %c0_9 = arith.constant 0 : index
    %4 = vector.load %arg2[%c0_6, %c1, %c0_7, %c0_8, %c0_9] : memref<1x4x2x4x16xf32, #tpu.memory_space<vmem>>, vector<1x1x1x4x16xf32>
    %5 = vector.shape_cast %4 : vector<1x1x1x4x16xf32> to vector<4x16xf32>
    %6 = tpu.transpose %5, [1, 0] : vector<4x16xf32> -> vector<16x4xf32>
    %c0_10 = arith.constant 0 : index
    %c4 = arith.constant 4 : index
    %7 = vector.load %arg5[%c0_10, %c4] : memref<16x16xf32, #tpu.memory_space<vmem>>, vector<16x4xf32>
    tpu.vector_store %arg5[%c0_10, %c4], %6 {strides = array<i32>} : memref<16x16xf32, #tpu.memory_space<vmem>>, vector<16x4xf32>,
    %c0_11 = arith.constant 0 : index
    %c2 = arith.constant 2 : index
    %c0_12 = arith.constant 0 : index
    %c0_13 = arith.constant 0 : index
    %c0_14 = arith.constant 0 : index
    %8 = vector.load %arg2[%c0_11, %c2, %c0_12, %c0_13, %c0_14] : memref<1x4x2x4x16xf32, #tpu.memory_space<vmem>>, vector<1x1x1x4x16xf32>
    %9 = vector.shape_cast %8 : vector<1x1x1x4x16xf32> to vector<4x16xf32>
    %10 = tpu.transpose %9, [1, 0] : vector<4x16xf32> -> vector<16x4xf32>
    %c0_15 = arith.constant 0 : index
    %c8 = arith.constant 8 : index
    %11 = vector.load %arg5[%c0_15, %c8] : memref<16x16xf32, #tpu.memory_space<vmem>>, vector<16x4xf32>
    tpu.vector_store %arg5[%c0_15, %c8], %10 {strides = array<i32>} : memref<16x16xf32, #tpu.memory_space<vmem>>, vector<16x4xf32>,
    %c0_16 = arith.constant 0 : index
    %c3 = arith.constant 3 : index
    %c0_17 = arith.constant 0 : index
    %c0_18 = arith.constant 0 : index
    %c0_19 = arith.constant 0 : index
    %12 = vector.load %arg2[%c0_16, %c3, %c0_17, %c0_18, %c0_19] : memref<1x4x2x4x16xf32, #tpu.memory_space<vmem>>, vector<1x1x1x4x16xf32>
    %13 = vector.shape_cast %12 : vector<1x1x1x4x16xf32> to vector<4x16xf32>
    %14 = tpu.transpose %13, [1, 0] : vector<4x16xf32> -> vector<16x4xf32>
    %c0_20 = arith.constant 0 : index
    %c12 = arith.constant 12 : index
    %15 = vector.load %arg5[%c0_20, %c12] : memref<16x16xf32, #tpu.memory_space<vmem>>, vector<16x4xf32>
    tpu.vector_store %arg5[%c0_20, %c12], %14 {strides = array<i32>} : memref<16x16xf32, #tpu.memory_space<vmem>>, vector<16x4xf32>,
    %c0_21 = arith.constant 0 : index
    %c0_22 = arith.constant 0 : index
    %16 = tpu.strided_load %arg5[%c0_21, %c0_22] {strides = array<i32: 4, 1>} : memref<16x16xf32, #tpu.memory_space<vmem>>, vector<4x16xf32>
    %c0_23 = arith.constant 0 : index
    %c0_24 = arith.constant 0 : index
    %17 = vector.load %arg6[%c0_23, %c0_24] : memref<4x64xf32, #tpu.memory_space<vmem>>, vector<4x16xf32>
    tpu.vector_store %arg6[%c0_23, %c0_24], %16 {strides = array<i32>} : memref<4x64xf32, #tpu.memory_space<vmem>>, vector<4x16xf32>,
    %c1_25 = arith.constant 1 : index
    %c0_26 = arith.constant 0 : index
    %18 = tpu.strided_load %arg5[%c1_25, %c0_26] {strides = array<i32: 4, 1>} : memref<16x16xf32, #tpu.memory_space<vmem>>, vector<4x16xf32>
    %c0_27 = arith.constant 0 : index
    %c16 = arith.constant 16 : index
    %19 = vector.load %arg6[%c0_27, %c16] : memref<4x64xf32, #tpu.memory_space<vmem>>, vector<4x16xf32>
    tpu.vector_store %arg6[%c0_27, %c16], %18 {strides = array<i32>} : memref<4x64xf32, #tpu.memory_space<vmem>>, vector<4x16xf32>,
    %c2_28 = arith.constant 2 : index
    %c0_29 = arith.constant 0 : index
    %20 = tpu.strided_load %arg5[%c2_28, %c0_29] {strides = array<i32: 4, 1>} : memref<16x16xf32, #tpu.memory_space<vmem>>, vector<4x16xf32>
    %c0_30 = arith.constant 0 : index
    %c32 = arith.constant 32 : index
    %21 = vector.load %arg6[%c0_30, %c32] : memref<4x64xf32, #tpu.memory_space<vmem>>, vector<4x16xf32>
    tpu.vector_store %arg6[%c0_30, %c32], %20 {strides = array<i32>} : memref<4x64xf32, #tpu.memory_space<vmem>>, vector<4x16xf32>,
    %c3_31 = arith.constant 3 : index
    %c0_32 = arith.constant 0 : index
    %22 = tpu.strided_load %arg5[%c3_31, %c0_32] {strides = array<i32: 4, 1>} : memref<16x16xf32, #tpu.memory_space<vmem>>, vector<4x16xf32>
    %c0_33 = arith.constant 0 : index
    %c48 = arith.constant 48 : index
    %23 = vector.load %arg6[%c0_33, %c48] : memref<4x64xf32, #tpu.memory_space<vmem>>, vector<4x16xf32>
    tpu.vector_store %arg6[%c0_33, %c48], %22 {strides = array<i32>} : memref<4x64xf32, #tpu.memory_space<vmem>>, vector<4x16xf32>,
    %c0_34 = arith.constant 0 : index
    %c0_35 = arith.constant 0 : index
    %24 = vector.load %arg6[%c0_34, %c0_35] : memref<4x64xf32, #tpu.memory_space<vmem>>, vector<4x64xf32>
    %25 = arith.truncf %24 : vector<4x64xf32> to vector<4x64xbf16>
    %c0_36 = arith.constant 0 : index
    %c0_37 = arith.constant 0 : index
    %26 = vector.load %arg3[%c0_36, %c0_37] : memref<64x64xbf16, #tpu.memory_space<vmem>>, vector<64x64xbf16>
    %cst = arith.constant dense<0.000000e+00> : vector<4x64xf32>
    %27 = tpu.matmul %25, %26, %cst {dimension_numbers = #tpu.dot_dimension_numbers<[1], [0], [0], [1], [0, 0, 1, 1], [], []>} : vector<4x64xbf16>, vector<64x64xbf16>, vector<4x64xf32> -> vector<4x64xf32>
    %c0_38 = arith.constant 0 : index
    %c0_39 = arith.constant 0 : index
    %c0_40 = arith.constant 0 : index
    %c0_41 = arith.constant 0 : index
    %28 = vector.load %arg4[%c0_38, %c0_39, %c0_40, %c0_41] : memref<1x2x4x64xf32, #tpu.memory_space<vmem>>, vector<1x1x4x64xf32>
    %29 = vector.shape_cast %28 : vector<1x1x4x64xf32> to vector<4x64xf32>
    %30 = vector.shape_cast %27 : vector<4x64xf32> to vector<1x1x4x64xf32>
    tpu.vector_store %arg4[%c0_38, %c0_39, %c0_40, %c0_41], %30 {strides = array<i32>} : memref<1x2x4x64xf32, #tpu.memory_space<vmem>>, vector<1x1x4x64xf32>,
    %c0_42 = arith.constant 0 : index
    %c0_43 = arith.constant 0 : index
    %c1_44 = arith.constant 1 : index
    %c0_45 = arith.constant 0 : index
    %c0_46 = arith.constant 0 : index
    %31 = vector.load %arg2[%c0_42, %c0_43, %c1_44, %c0_45, %c0_46] : memref<1x4x2x4x16xf32, #tpu.memory_space<vmem>>, vector<1x1x1x4x16xf32>
    %32 = vector.shape_cast %31 : vector<1x1x1x4x16xf32> to vector<4x16xf32>
    %33 = tpu.transpose %32, [1, 0] : vector<4x16xf32> -> vector<16x4xf32>
    %c0_47 = arith.constant 0 : index
    %c0_48 = arith.constant 0 : index
    %34 = vector.load %arg5[%c0_47, %c0_48] : memref<16x16xf32, #tpu.memory_space<vmem>>, vector<16x4xf32>
    tpu.vector_store %arg5[%c0_47, %c0_48], %33 {strides = array<i32>} : memref<16x16xf32, #tpu.memory_space<vmem>>, vector<16x4xf32>,
    %c0_49 = arith.constant 0 : index
    %c1_50 = arith.constant 1 : index
    %c1_51 = arith.constant 1 : index
    %c0_52 = arith.constant 0 : index
    %c0_53 = arith.constant 0 : index
    %35 = vector.load %arg2[%c0_49, %c1_50, %c1_51, %c0_52, %c0_53] : memref<1x4x2x4x16xf32, #tpu.memory_space<vmem>>, vector<1x1x1x4x16xf32>
    %36 = vector.shape_cast %35 : vector<1x1x1x4x16xf32> to vector<4x16xf32>
    %37 = tpu.transpose %36, [1, 0] : vector<4x16xf32> -> vector<16x4xf32>
    %c0_54 = arith.constant 0 : index
    %c4_55 = arith.constant 4 : index
    %38 = vector.load %arg5[%c0_54, %c4_55] : memref<16x16xf32, #tpu.memory_space<vmem>>, vector<16x4xf32>
    tpu.vector_store %arg5[%c0_54, %c4_55], %37 {strides = array<i32>} : memref<16x16xf32, #tpu.memory_space<vmem>>, vector<16x4xf32>,
    %c0_56 = arith.constant 0 : index
    %c2_57 = arith.constant 2 : index
    %c1_58 = arith.constant 1 : index
    %c0_59 = arith.constant 0 : index
    %c0_60 = arith.constant 0 : index
    %39 = vector.load %arg2[%c0_56, %c2_57, %c1_58, %c0_59, %c0_60] : memref<1x4x2x4x16xf32, #tpu.memory_space<vmem>>, vector<1x1x1x4x16xf32>
    %40 = vector.shape_cast %39 : vector<1x1x1x4x16xf32> to vector<4x16xf32>
    %41 = tpu.transpose %40, [1, 0] : vector<4x16xf32> -> vector<16x4xf32>
    %c0_61 = arith.constant 0 : index
    %c8_62 = arith.constant 8 : index
    %42 = vector.load %arg5[%c0_61, %c8_62] : memref<16x16xf32, #tpu.memory_space<vmem>>, vector<16x4xf32>
    tpu.vector_store %arg5[%c0_61, %c8_62], %41 {strides = array<i32>} : memref<16x16xf32, #tpu.memory_space<vmem>>, vector<16x4xf32>,
    %c0_63 = arith.constant 0 : index
    %c3_64 = arith.constant 3 : index
    %c1_65 = arith.constant 1 : index
    %c0_66 = arith.constant 0 : index
    %c0_67 = arith.constant 0 : index
    %43 = vector.load %arg2[%c0_63, %c3_64, %c1_65, %c0_66, %c0_67] : memref<1x4x2x4x16xf32, #tpu.memory_space<vmem>>, vector<1x1x1x4x16xf32>
    %44 = vector.shape_cast %43 : vector<1x1x1x4x16xf32> to vector<4x16xf32>
    %45 = tpu.transpose %44, [1, 0] : vector<4x16xf32> -> vector<16x4xf32>
    %c0_68 = arith.constant 0 : index
    %c12_69 = arith.constant 12 : index
    %46 = vector.load %arg5[%c0_68, %c12_69] : memref<16x16xf32, #tpu.memory_space<vmem>>, vector<16x4xf32>
    tpu.vector_store %arg5[%c0_68, %c12_69], %45 {strides = array<i32>} : memref<16x16xf32, #tpu.memory_space<vmem>>, vector<16x4xf32>,
    %c0_70 = arith.constant 0 : index
    %c0_71 = arith.constant 0 : index
    %47 = tpu.strided_load %arg5[%c0_70, %c0_71] {strides = array<i32: 4, 1>} : memref<16x16xf32, #tpu.memory_space<vmem>>, vector<4x16xf32>
    %c0_72 = arith.constant 0 : index
    %c0_73 = arith.constant 0 : index
    %48 = vector.load %arg6[%c0_72, %c0_73] : memref<4x64xf32, #tpu.memory_space<vmem>>, vector<4x16xf32>
    tpu.vector_store %arg6[%c0_72, %c0_73], %47 {strides = array<i32>} : memref<4x64xf32, #tpu.memory_space<vmem>>, vector<4x16xf32>,
    %c1_74 = arith.constant 1 : index
    %c0_75 = arith.constant 0 : index
    %49 = tpu.strided_load %arg5[%c1_74, %c0_75] {strides = array<i32: 4, 1>} : memref<16x16xf32, #tpu.memory_space<vmem>>, vector<4x16xf32>
    %c0_76 = arith.constant 0 : index
    %c16_77 = arith.constant 16 : index
    %50 = vector.load %arg6[%c0_76, %c16_77] : memref<4x64xf32, #tpu.memory_space<vmem>>, vector<4x16xf32>
    tpu.vector_store %arg6[%c0_76, %c16_77], %49 {strides = array<i32>} : memref<4x64xf32, #tpu.memory_space<vmem>>, vector<4x16xf32>,
    %c2_78 = arith.constant 2 : index
    %c0_79 = arith.constant 0 : index
    %51 = tpu.strided_load %arg5[%c2_78, %c0_79] {strides = array<i32: 4, 1>} : memref<16x16xf32, #tpu.memory_space<vmem>>, vector<4x16xf32>
    %c0_80 = arith.constant 0 : index
    %c32_81 = arith.constant 32 : index
    %52 = vector.load %arg6[%c0_80, %c32_81] : memref<4x64xf32, #tpu.memory_space<vmem>>, vector<4x16xf32>
    tpu.vector_store %arg6[%c0_80, %c32_81], %51 {strides = array<i32>} : memref<4x64xf32, #tpu.memory_space<vmem>>, vector<4x16xf32>,
    %c3_82 = arith.constant 3 : index
    %c0_83 = arith.constant 0 : index
    %53 = tpu.strided_load %arg5[%c3_82, %c0_83] {strides = array<i32: 4, 1>} : memref<16x16xf32, #tpu.memory_space<vmem>>, vector<4x16xf32>
    %c0_84 = arith.constant 0 : index
    %c48_85 = arith.constant 48 : index
    %54 = vector.load %arg6[%c0_84, %c48_85] : memref<4x64xf32, #tpu.memory_space<vmem>>, vector<4x16xf32>
    tpu.vector_store %arg6[%c0_84, %c48_85], %53 {strides = array<i32>} : memref<4x64xf32, #tpu.memory_space<vmem>>, vector<4x16xf32>,
    %c0_86 = arith.constant 0 : index
    %c0_87 = arith.constant 0 : index
    %55 = vector.load %arg6[%c0_86, %c0_87] : memref<4x64xf32, #tpu.memory_space<vmem>>, vector<4x64xf32>
    %56 = arith.truncf %55 : vector<4x64xf32> to vector<4x64xbf16>
    %c0_88 = arith.constant 0 : index
    %c0_89 = arith.constant 0 : index
    %57 = vector.load %arg3[%c0_88, %c0_89] : memref<64x64xbf16, #tpu.memory_space<vmem>>, vector<64x64xbf16>
    %cst_90 = arith.constant dense<0.000000e+00> : vector<4x64xf32>
    %58 = tpu.matmul %56, %57, %cst_90 {dimension_numbers = #tpu.dot_dimension_numbers<[1], [0], [0], [1], [0, 0, 1, 1], [], []>} : vector<4x64xbf16>, vector<64x64xbf16>, vector<4x64xf32> -> vector<4x64xf32>
    %c0_91 = arith.constant 0 : index
    %c1_92 = arith.constant 1 : index
    %c0_93 = arith.constant 0 : index
    %c0_94 = arith.constant 0 : index
    %59 = vector.load %arg4[%c0_91, %c1_92, %c0_93, %c0_94] : memref<1x2x4x64xf32, #tpu.memory_space<vmem>>, vector<1x1x4x64xf32>
    %60 = vector.shape_cast %59 : vector<1x1x4x64xf32> to vector<4x64xf32>
    %61 = vector.shape_cast %58 : vector<4x64xf32> to vector<1x1x4x64xf32>
    tpu.vector_store %arg4[%c0_91, %c1_92, %c0_93, %c0_94], %61 {strides = array<i32>} : memref<1x2x4x64xf32, #tpu.memory_space<vmem>>, vector<1x1x4x64xf32>,
    return
  }
  func.func @transform_0(%arg0: i32, %arg1: i32) -> (i32, i32, i32, i32, i32) {
    %c0_i32 = arith.constant 0 : i32
    %c0_i32_0 = arith.constant 0 : i32
    %c0_i32_1 = arith.constant 0 : i32
    %c0_i32_2 = arith.constant 0 : i32
    return %arg0, %c0_i32, %arg1, %c0_i32_0, %c0_i32_1 : i32, i32, i32, i32, i32
  }
  func.func @transform_1(%arg0: i32, %arg1: i32) -> (i32, i32) {
    %c0_i32 = arith.constant 0 : i32
    %c0_i32_0 = arith.constant 0 : i32
    %c0_i32_1 = arith.constant 0 : i32
    return %c0_i32, %c0_i32_0 : i32, i32
  }
  func.func @transform_2(%arg0: i32, %arg1: i32) -> (i32, i32, i32, i32) {
    %c0_i32 = arith.constant 0 : i32
    %c0_i32_0 = arith.constant 0 : i32
    %c0_i32_1 = arith.constant 0 : i32
    return %arg0, %arg1, %c0_i32, %c0_i32_0 : i32, i32, i32, i32
  }
}

</mosaic_0001>

<llo_original>
// kernel: tpu_custom_call.1
$region0: #{tpu_custom_call.1}
  #allocation0 [shape = 'u32[]', space=smem, size = 0x4, offset = 0x4, fixed_abs, tag = 'smem constant byte address 0x4 - core index']
  #allocation1 [shape = 'u32[144,128]{1,0:T(1,128)}', space=vmem, size = 0x12000, scoped, tag = 'internal scratch']
  #allocation2 [shape = 'f32[16,16]{1,0:T(8,128)}', space=vmem, size = 0x2000, scoped, tag = 'scratch operand']
  #allocation3 [shape = 'f32[4,64]{1,0:T(4,128)}', space=vmem, size = 0x800, scoped, tag = 'scratch operand']
  #allocation10 [shape = 's32[]', space=sflag, size = 0x4, offset = 0, fixed_abs, tag = 'sflag constant byte address 0x0 - dummy sync flag']
  %s0 = inlined_call_operand.hbm [shape: f32[2,4,4,4,16], index: 0, kind: input, shape index: {}]
  %s1 = inlined_call_operand.hbm [shape: bf16[64,64], index: 1, kind: input, shape index: {}]
  %s2 = inlined_call_operand.hbm [shape: f32[2,4,4,64], index: 2, kind: output, shape index: {}]
  %s3 = sld [smem:[#allocation0]]
  $region49: #{tpu_custom_call.1} parent=0
    _
  %s5 = ssub.s32 1, %s3
  %s6 = scalar_select 0, %s5, %s3
  $region1: #{tpu_custom_call.1} parent=0
    #allocation4 [shape = 'u8[32768]{0}', space=vmem, size = 0x8000, scoped, tag = 'input window, operand 0']
    #allocation5 [shape = 's32[2]{0}', space=sflag, size = 0x8, scoped, tag = 'scoped memory for tpu_custom_call.1']
    #allocation6 [shape = 's32[2]{0}', space=sflag, size = 0x8, scoped, tag = 'scoped memory for tpu_custom_call.1']
    #allocation7 [shape = 'u8[16384]{0}', space=vmem, size = 0x4000, scoped, tag = 'input window, operand 1, single buffered']
    #allocation8 [shape = 's32[1]{0}', space=sflag, size = 0x4, scoped, tag = 'scoped memory for tpu_custom_call.1']
    #allocation9 [shape = 'u8[8192]{0}', space=vmem, size = 0x2000, scoped, tag = 'output window, operand 0']
    %7 = vsyncpa [#allocation5], 0
    %s8 = scalar_lea.sflag [#allocation5], 1
    %9 = vsyncpa %s8, 0
    %10 = vsyncpa [#allocation8], 0
    %11 = vsyncpa [#allocation6], 0
    %s12 = scalar_lea.sflag [#allocation6], 1
    %13 = vsyncpa %s12, 0
    loop: start=0, step=1, limit=6
    $region2: #{tpu_custom_call.1} parent=1 // loop_pre_header
      _
    $region3: #{tpu_custom_call.1} parent=1 // loop_header
      %s15 = sphi 0, %s19
      %p16 = scmp.ge.s32.totalorder %s15, 6
      %s22 = sphi 0, %s34
      %s23 = sphi 0, %s30
      %s24 = sphi 0, %s22
      %s25 = sphi 0, %s23
      %s26 = sphi 0, %s24
      %s27 = sphi 0, %s25
      %s39 = sphi 0, %s41
      %s42 = sphi 0, %s39
      %s43 = sphi 0, %s42
      %s59 = sphi 0, %s43
      %s63 = sphi 0, %s63
      %s65 = sphi 0, %s63
      %s66 = sphi 0, %s65
      %s80 = sphi 0, %s66
      %s88 = sphi 0, %s90
      %s91 = sphi 0, %s88
      %s92 = sphi 0, %s91
      %s108 = sphi 0, %s92
    $region4: #{tpu_custom_call.1} parent=1 // loop_header_branch
      %18 = sbr.rel (%p16) target = $region8
    $region5: #{tpu_custom_call.1} parent=1 // loop_body
      %s20 = ssub.s32 %s15, 1
      %s21 = ssub.s32 %s15, 2
      %s28 = sadd.s32 1, %s23
      %p29 = scmp.ge.s32.totalorder %s28, 2
      %s30 = scalar_select %p29, 0, %s28
      %s31 = sadd.s32 1, %s22
      %s32 = scalar_select %p29, %s31, %s22
      %p33 = scmp.ge.s32.totalorder %s32, 2
      %s34 = scalar_select %p33, 0, %s32
      %s35 = ssub.s32 %s22, %s34
      %s36 = ssub.s32 %s23, %s30
      %s37 = sor.u32 %s35, %s36
      %p38 = scmp.eq.s32.totalorder %s37, 0
      %s40 = sadd.s32 %s39, 1
      %s41 = scalar_select %p38, %s39, %s40
      %p44 = pneg %p38
      %p45 = scmp.eq.s32.totalorder %s15, 3
      %p46 = por %p44, %p45
      %p47 = scmp.ne.s32.totalorder %s39, %s42
      %p48 = scmp.eq.s32.totalorder %s15, 0
      %p49 = por %p47, %p48
      %p50 = scmp.ne.s32.totalorder %s39, %s42
      %p51 = scmp.eq.s32.totalorder %s20, 3
      %p52 = por %p50, %p51
      %p53 = scmp.ne.s32.totalorder %s42, %s43
      %p54 = scmp.eq.s32.totalorder %s20, 0
      %p55 = por %p53, %p54
      %p56 = scmp.ne.s32.totalorder %s42, %s43
      %p57 = scmp.eq.s32.totalorder %s21, 3
      %p58 = por %p56, %p57
      %p60 = scmp.ne.s32.totalorder %s43, %s59
      %p61 = scmp.eq.s32.totalorder %s21, 0
      %p62 = por %p60, %p61
      %s64 = sadd.s32 %s63, 1
      %p67 = scmp.eq.s32.totalorder %s15, 3
      %p68 = scmp.ne.s32.totalorder %s63, %s65
      %p69 = scmp.eq.s32.totalorder %s15, 0
      %p70 = por %p68, %p69
      %p71 = scmp.ne.s32.totalorder %s63, %s65
      %p72 = scmp.eq.s32.totalorder %s20, 3
      %p73 = por %p71, %p72
      %p74 = scmp.ne.s32.totalorder %s65, %s66
      %p75 = scmp.eq.s32.totalorder %s20, 0
      %p76 = por %p74, %p75
      %p77 = scmp.ne.s32.totalorder %s65, %s66
      %p78 = scmp.eq.s32.totalorder %s21, 3
      %p79 = por %p77, %p78
      %p81 = scmp.ne.s32.totalorder %s66, %s80
      %p82 = scmp.eq.s32.totalorder %s21, 0
      %p83 = por %p81, %p82
      %s84 = ssub.s32 %s22, %s34
      %s85 = ssub.s32 %s23, %s30
      %s86 = sor.u32 %s84, %s85
      %p87 = scmp.eq.s32.totalorder %s86, 0
      %s89 = sadd.s32 %s88, 1
      %s90 = scalar_select %p87, %s88, %s89
      %p93 = pneg %p87
      %p94 = scmp.eq.s32.totalorder %s15, 3
      %p95 = por %p93, %p94
      %p96 = scmp.ne.s32.totalorder %s88, %s91
      %p97 = scmp.eq.s32.totalorder %s15, 0
      %p98 = por %p96, %p97
      %p99 = scmp.ne.s32.totalorder %s88, %s91
      %p100 = scmp.eq.s32.totalorder %s20, 3
      %p101 = por %p99, %p100
      %p102 = scmp.ne.s32.totalorder %s91, %s92
      %p103 = scmp.eq.s32.totalorder %s20, 0
      %p104 = por %p102, %p103
      %p105 = scmp.ne.s32.totalorder %s91, %s92
      %p106 = scmp.eq.s32.totalorder %s21, 3
      %p107 = por %p105, %p106
      %p109 = scmp.ne.s32.totalorder %s92, %s108
      %p110 = scmp.eq.s32.totalorder %s21, 0
      %p111 = por %p109, %p110
      %p112 = scmp.le.s32.totalorder 1, %s15
      %p113 = scmp.lt.s32.totalorder %s15, 5
      %p114 = pnand %p112, %p113
      %p115 = pneg %p114
      // Predicated region
      $region9: #{tpu_custom_call.1} parent=5 // pred_check
        _
      $region10: #{tpu_custom_call.1} parent=5 // pred_check_branch
        %117 = sbr.rel (%p114) target = $region12
      $region11: #{tpu_custom_call.1} parent=5 // pred_region
        %s118 = ssub.s32 %s15, 1
        // Predicated region
        $region13: #{tpu_custom_call.1} parent=11 // pred_check
          %p119 = pneg %p76
        $region14: #{tpu_custom_call.1} parent=11 // pred_check_branch
          %121 = sbr.rel (%p119) target = $region16
        $region15: #{tpu_custom_call.1} parent=11 // pred_region
          %s123 = ssub.s32 512, 512
          %124 = vsyncadd [#allocation8], %s123
          %s125 = sshll.u32 [#allocation7], 4
          %s126 = int_to_ptr.vmem [resolvable:$true] %s125
          %131 = dma.hbm_to_vmem [thread:$0]  %s1, 512, %s126, [#allocation8], 64, 64, 4
        $region16: #{tpu_custom_call.1} parent=11 // pred_fallthru
          _
      $region12: #{tpu_custom_call.1} parent=5 // pred_fallthru
        _
      %p132 = scmp.lt.s32.totalorder %s15, 4
      // Predicated region
      $region17: #{tpu_custom_call.1} parent=5 // pred_check
        %p133 = pneg %p132
      $region18: #{tpu_custom_call.1} parent=5 // pred_check_branch
        %135 = sbr.rel (%p133) target = $region20
      $region19: #{tpu_custom_call.1} parent=5 // pred_region
        // Predicated region
        $region21: #{tpu_custom_call.1} parent=19 // pred_check
          %p136 = pneg %p49
        $region22: #{tpu_custom_call.1} parent=19 // pred_check_branch
          %138 = sbr.rel (%p136) target = $region24
        $region23: #{tpu_custom_call.1} parent=19 // pred_region
          #allocation11 [shape = 'u32[6]{0}', space=smem, size = 0x18, scoped, tag = 'DMA stride descriptor']
          %s139 = sand.u32 %s39, 1
          %s140 = scalar_lea.sflag [#allocation5], %s139
          %s141 = sand.u32 %s39, 1
          %s142 = smul.addr %s141, 32
          %s143 = scalar_lea.vmem [#allocation4], %s142
          %s144 = smul.u32 2, %s23
          %s146 = ssub.s32 512, 512
          %147 = vsyncadd %s140, %s146
          %s148 = smul.addr %s22, 16
          %s149 = sadd.s32 %s144, %s148
          %s150 = smul.addr %s149, 64
          %s151 = scalar_lea.hbm %s0, %s150
          %s153 = sshll.u32 1, 14
          %s154 = sxor.u32 4294967295, %s153
          %s156 = sld [smem:[#allocation0]]
          %s157 = sadd.s32 2, %s156
          %s159 = sshll.u32 7, 26
          %s160 = sxor.u32 4294967295, %s159
          %s161 = sand.u32 0, %s160
          %s162 = sshll.u32 %s157, 26
          %s163 = sor.u32 %s161, %s162
          %s164 = sshll.u32 %s143, 4
          %s165 = int_to_ptr.vmem [resolvable:$true] %s164
          %171 = sst [smem:[#allocation11]] 256
          %s172 = scalar_lea.smem [#allocation11], 1
          %173 = sst [smem:[%s172]] 128
          %s174 = scalar_lea.smem [#allocation11], 2
          %175 = sst [smem:[%s174]] 2
          %s176 = scalar_lea.smem [#allocation11], 3
          %177 = sst [smem:[%s176]] 64
          %s178 = scalar_lea.smem [#allocation11], 4
          %179 = sst [smem:[%s178]] 64
          %s180 = scalar_lea.smem [#allocation11], 5
          %181 = sst [smem:[%s180]] 4
          %183 = dma.general %s151, 512, %s165, %s140, 131072, [#allocation11], %s163, 0
        $region24: #{tpu_custom_call.1} parent=19 // pred_fallthru
          _
      $region20: #{tpu_custom_call.1} parent=5 // pred_fallthru
        _
      %p184 = scmp.le.s32.totalorder 1, %s15
      %p185 = scmp.lt.s32.totalorder %s15, 5
      %p186 = pnand %p184, %p185
      %p187 = pneg %p186
      // Predicated region
      $region25: #{tpu_custom_call.1} parent=5 // pred_check
        _
      $region26: #{tpu_custom_call.1} parent=5 // pred_check_branch
        %189 = sbr.rel (%p186) target = $region28
      $region27: #{tpu_custom_call.1} parent=5 // pred_region
        %s190 = ssub.s32 %s15, 1
        %s191 = sand.u32 %s42, 1
        %s192 = scalar_lea.sflag [#allocation5], %s191
        %s193 = sand.u32 %s42, 1
        %s194 = smul.addr %s193, 32
        %s195 = scalar_lea.vmem [#allocation4], %s194
        // Predicated region
        $region29: #{tpu_custom_call.1} parent=27 // pred_check
          %p196 = pneg %p55
        $region30: #{tpu_custom_call.1} parent=27 // pred_check_branch
          %198 = sbr.rel (%p196) target = $region32
        $region31: #{tpu_custom_call.1} parent=27 // pred_region
          %199 = dma.done %s192, 512
        $region32: #{tpu_custom_call.1} parent=27 // pred_fallthru
          _
        // Predicated region
        $region33: #{tpu_custom_call.1} parent=27 // pred_check
          %p200 = pneg %p76
        $region34: #{tpu_custom_call.1} parent=27 // pred_check_branch
          %202 = sbr.rel (%p200) target = $region36
        $region35: #{tpu_custom_call.1} parent=27 // pred_region
          %203 = dma.done [#allocation8], 512
        $region36: #{tpu_custom_call.1} parent=27 // pred_fallthru
          _
        %s204 = sand.u32 %s42, 1
        %s205 = scalar_lea.sflag [#allocation5], %s204
        %s206 = sand.u32 %s42, 1
        %s207 = smul.addr %s206, 32
        %s208 = scalar_lea.vmem [#allocation4], %s207
        %p209 = pneg %p55
        %p210 = pneg %p52
        %p211 = pneg %p76
        %p212 = pneg %p73
        %p213 = pneg %p104
        %p214 = pneg %p101
        %s215 = sand.u32 %s91, 1
        %s216 = scalar_lea.sflag [#allocation6], %s215
        %s217 = sand.u32 %s91, 1
        %s218 = smul.addr %s217, 8
        %s219 = scalar_lea.vmem [#allocation9], %s218
        %s220 = smul.u32 2, %s25
        %s221 = smul.u32 2, %s25
        %v223 = vld [vmem:[%s195] sm:$0xf]
        %224 = vxpose.xlu0.b32.start [1/16] %v223, 128
        %225 = vxpose.xlu0.b32.cont [2/16] 0.0, 128
        %226 = vxpose.xlu0.b32.cont [3/16] 0.0, 128
        %227 = vxpose.xlu0.b32.cont [4/16] 0.0, 128
        %228 = vxpose.xlu0.b32.cont [5/16] 0.0, 128
        %229 = vxpose.xlu0.b32.cont [6/16] 0.0, 128
        %230 = vxpose.xlu0.b32.cont [7/16] 0.0, 128
        %231 = vxpose.xlu0.b32.cont [8/16] 0.0, 128
        %232 = vxpose.xlu0.b32.cont [9/16] 0.0, 128
        %233 = vxpose.xlu0.b32.cont [10/16] 0.0, 128
        %234 = vxpose.xlu0.b32.cont [11/16] 0.0, 128
        %235 = vxpose.xlu0.b32.cont [12/16] 0.0, 128
        %236 = vxpose.xlu0.b32.cont [13/16] 0.0, 128
        %237 = vxpose.xlu0.b32.cont [14/16] 0.0, 128
        %238 = vxpose.xlu0.b32.cont [15/16] 0.0, 128
        %239 = vxpose.xlu0.b32.end [16/16] 0.0, 128
        %v240 = vpop.trf.xlu0
        %v241 = vpop.trf.xlu0
        %v242 = vpop.trf.xlu0
        %v243 = vpop.trf.xlu0
        %v244 = vpop.trf.xlu0
        %v245 = vpop.trf.xlu0
        %v246 = vpop.trf.xlu0
        %v247 = vpop.trf.xlu0
        %v248 = vpop.trf.xlu0
        %v249 = vpop.trf.xlu0
        %v250 = vpop.trf.xlu0
        %v251 = vpop.trf.xlu0
        %v252 = vpop.trf.xlu0
        %v253 = vpop.trf.xlu0
        %v254 = vpop.trf.xlu0
        %v255 = vpop.trf.xlu0
        %vm256 = vcmask 31744
        %257 = vst.msk [vmem:[#allocation2] sm:$0xff] %vm256, %v240
        %258 = vst.msk [vmem:[#allocation2 + $0x8] sm:$0xff] %vm256, %v241
        %s259 = scalar_lea.vmem %s195, 8 [#allocation4]
        %v260 = vld [vmem:[%s259] sm:$0xf]
        %261 = vxpose.xlu0.b32.start [1/16] %v260, 128
        %262 = vxpose.xlu0.b32.cont [2/16] 0.0, 128
        %263 = vxpose.xlu0.b32.cont [3/16] 0.0, 128
        %264 = vxpose.xlu0.b32.cont [4/16] 0.0, 128
        %265 = vxpose.xlu0.b32.cont [5/16] 0.0, 128
        %266 = vxpose.xlu0.b32.cont [6/16] 0.0, 128
        %267 = vxpose.xlu0.b32.cont [7/16] 0.0, 128
        %268 = vxpose.xlu0.b32.cont [8/16] 0.0, 128
        %269 = vxpose.xlu0.b32.cont [9/16] 0.0, 128
        %270 = vxpose.xlu0.b32.cont [10/16] 0.0, 128
        %271 = vxpose.xlu0.b32.cont [11/16] 0.0, 128
        %272 = vxpose.xlu0.b32.cont [12/16] 0.0, 128
        %273 = vxpose.xlu0.b32.cont [13/16] 0.0, 128
        %274 = vxpose.xlu0.b32.cont [14/16] 0.0, 128
        %275 = vxpose.xlu0.b32.cont [15/16] 0.0, 128
        %276 = vxpose.xlu0.b32.end [16/16] 0.0, 128
        %v277 = vpop.trf.xlu0
        %v278 = vpop.trf.xlu0
        %v279 = vpop.trf.xlu0
        %v280 = vpop.trf.xlu0
        %v281 = vpop.trf.xlu0
        %v282 = vpop.trf.xlu0
        %v283 = vpop.trf.xlu0
        %v284 = vpop.trf.xlu0
        %v285 = vpop.trf.xlu0
        %v286 = vpop.trf.xlu0
        %v287 = vpop.trf.xlu0
        %v288 = vpop.trf.xlu0
        %v289 = vpop.trf.xlu0
        %v290 = vpop.trf.xlu0
        %v291 = vpop.trf.xlu0
        %v292 = vpop.trf.xlu0
        %295 = vrot.lane.b32.xlu0 %v277, 4
        %v296 = vpop.permute.xlu0 %295
        %297 = vrot.lane.b32.xlu0 %v278, 4
        %v298 = vpop.permute.xlu0 %297
        %vm301 = vcmask 64544
        %302 = vst.msk [vmem:[#allocation2] sm:$0xff] %vm301, %v296
        %303 = vst.msk [vmem:[#allocation2 + $0x8] sm:$0xff] %vm301, %v298
        %s304 = scalar_lea.vmem %s195, 16 [#allocation4]
        %v305 = vld [vmem:[%s304] sm:$0xf]
        %306 = vxpose.xlu0.b32.start [1/16] %v305, 128
        %307 = vxpose.xlu0.b32.cont [2/16] 0.0, 128
        %308 = vxpose.xlu0.b32.cont [3/16] 0.0, 128
        %309 = vxpose.xlu0.b32.cont [4/16] 0.0, 128
        %310 = vxpose.xlu0.b32.cont [5/16] 0.0, 128
        %311 = vxpose.xlu0.b32.cont [6/16] 0.0, 128
        %312 = vxpose.xlu0.b32.cont [7/16] 0.0, 128
        %313 = vxpose.xlu0.b32.cont [8/16] 0.0, 128
        %314 = vxpose.xlu0.b32.cont [9/16] 0.0, 128
        %315 = vxpose.xlu0.b32.cont [10/16] 0.0, 128
        %316 = vxpose.xlu0.b32.cont [11/16] 0.0, 128
        %317 = vxpose.xlu0.b32.cont [12/16] 0.0, 128
        %318 = vxpose.xlu0.b32.cont [13/16] 0.0, 128
        %319 = vxpose.xlu0.b32.cont [14/16] 0.0, 128
        %320 = vxpose.xlu0.b32.cont [15/16] 0.0, 128
        %321 = vxpose.xlu0.b32.end [16/16] 0.0, 128
        %v322 = vpop.trf.xlu0
        %v323 = vpop.trf.xlu0
        %v324 = vpop.trf.xlu0
        %v325 = vpop.trf.xlu0
        %v326 = vpop.trf.xlu0
        %v327 = vpop.trf.xlu0
        %v328 = vpop.trf.xlu0
        %v329 = vpop.trf.xlu0
        %v330 = vpop.trf.xlu0
        %v331 = vpop.trf.xlu0
        %v332 = vpop.trf.xlu0
        %v333 = vpop.trf.xlu0
        %v334 = vpop.trf.xlu0
        %v335 = vpop.trf.xlu0
        %v336 = vpop.trf.xlu0
        %v337 = vpop.trf.xlu0
        %340 = vrot.lane.b32.xlu0 %v322, 8
        %v341 = vpop.permute.xlu0 %340
        %342 = vrot.lane.b32.xlu0 %v323, 8
        %v343 = vpop.permute.xlu0 %342
        %vm346 = vcmask 97344
        %347 = vst.msk [vmem:[#allocation2] sm:$0xff] %vm346, %v341
        %348 = vst.msk [vmem:[#allocation2 + $0x8] sm:$0xff] %vm346, %v343
        %s349 = scalar_lea.vmem %s195, 24 [#allocation4]
        %v350 = vld [vmem:[%s349] sm:$0xf]
        %351 = vxpose.xlu0.b32.start [1/16] %v350, 128
        %352 = vxpose.xlu0.b32.cont [2/16] 0.0, 128
        %353 = vxpose.xlu0.b32.cont [3/16] 0.0, 128
        %354 = vxpose.xlu0.b32.cont [4/16] 0.0, 128
        %355 = vxpose.xlu0.b32.cont [5/16] 0.0, 128
        %356 = vxpose.xlu0.b32.cont [6/16] 0.0, 128
        %357 = vxpose.xlu0.b32.cont [7/16] 0.0, 128
        %358 = vxpose.xlu0.b32.cont [8/16] 0.0, 128
        %359 = vxpose.xlu0.b32.cont [9/16] 0.0, 128
        %360 = vxpose.xlu0.b32.cont [10/16] 0.0, 128
        %361 = vxpose.xlu0.b32.cont [11/16] 0.0, 128
        %362 = vxpose.xlu0.b32.cont [12/16] 0.0, 128
        %363 = vxpose.xlu0.b32.cont [13/16] 0.0, 128
        %364 = vxpose.xlu0.b32.cont [14/16] 0.0, 128
        %365 = vxpose.xlu0.b32.cont [15/16] 0.0, 128
        %366 = vxpose.xlu0.b32.end [16/16] 0.0, 128
        %v367 = vpop.trf.xlu0
        %v368 = vpop.trf.xlu0
        %v369 = vpop.trf.xlu0
        %v370 = vpop.trf.xlu0
        %v371 = vpop.trf.xlu0
        %v372 = vpop.trf.xlu0
        %v373 = vpop.trf.xlu0
        %v374 = vpop.trf.xlu0
        %v375 = vpop.trf.xlu0
        %v376 = vpop.trf.xlu0
        %v377 = vpop.trf.xlu0
        %v378 = vpop.trf.xlu0
        %v379 = vpop.trf.xlu0
        %v380 = vpop.trf.xlu0
        %v381 = vpop.trf.xlu0
        %v382 = vpop.trf.xlu0
        %385 = vrot.lane.b32.xlu0 %v367, 12
        %v386 = vpop.permute.xlu0 %385
        %387 = vrot.lane.b32.xlu0 %v368, 12
        %v388 = vpop.permute.xlu0 %387
        %vm391 = vcmask 130144
        %392 = vst.msk [vmem:[#allocation2] sm:$0xff] %vm391, %v386
        %393 = vst.msk [vmem:[#allocation2 + $0x8] sm:$0xff] %vm391, %v388
        %v394 = vld [vmem:[#allocation2] ss:$4 sm:$0xf]
        %vm395 = vcmask 125952
        %396 = vst.msk [vmem:[#allocation3] sm:$0xf] %vm395, %v394
        %s397 = scalar_lea.vmem [#allocation2], 1
        %v398 = vld [vmem:[%s397] ss:$4 sm:$0xf]
        %400 = vrot.lane.b32.xlu0 %v398, 16
        %v401 = vpop.permute.xlu0 %400
        %vm403 = vcmask 257152
        %404 = vst.msk [vmem:[#allocation3] sm:$0xf] %vm403, %v401
        %s405 = scalar_lea.vmem [#allocation2], 2
        %v406 = vld [vmem:[%s405] ss:$4 sm:$0xf]
        %408 = vrot.lane.b32.xlu0 %v406, 32
        %v409 = vpop.permute.xlu0 %408
        %vm411 = vcmask 388352
        %412 = vst.msk [vmem:[#allocation3] sm:$0xf] %vm411, %v409
        %s413 = scalar_lea.vmem [#allocation2], 3
        %v414 = vld [vmem:[%s413] ss:$4 sm:$0xf]
        %416 = vrot.lane.b32.xlu0 %v414, 48
        %v417 = vpop.permute.xlu0 %416
        %vm419 = vcmask 519552
        %420 = vst.msk [vmem:[#allocation3] sm:$0xf] %vm419, %v417
        %v421 = vld [vmem:[#allocation3] sm:$0xf]
        %v422 = vpack.c.bf16 %v421, %v421
        %v423 = vld [vmem:[#allocation7] sm:$0xf]
        %v424 = vld [vmem:[#allocation7 + $0x4] sm:$0xf]
        %v425 = vld [vmem:[#allocation7 + $0x8] sm:$0xf]
        %v426 = vld [vmem:[#allocation7 + $0xc] sm:$0xf]
        %v427 = vld [vmem:[#allocation7 + $0x10] sm:$0xf]
        %v428 = vld [vmem:[#allocation7 + $0x14] sm:$0xf]
        %v429 = vld [vmem:[#allocation7 + $0x18] sm:$0xf]
        %v430 = vld [vmem:[#allocation7 + $0x1c] sm:$0xf]
        %v439 = vunpack.c.l.b16 %v423
        %v440 = vunpack.c.l.b16 %v424
        %v441 = vunpack.c.l.b16 %v425
        %v442 = vunpack.c.l.b16 %v426
        %v443 = vunpack.c.l.b16 %v427
        %v444 = vunpack.c.l.b16 %v428
        %v445 = vunpack.c.l.b16 %v429
        %v446 = vunpack.c.l.b16 %v430
        %v447 = vpack.c.b16 %v440, %v439
        %v448 = vpack.c.b16 %v442, %v441
        %v449 = vpack.c.b16 %v444, %v443
        %v450 = vpack.c.b16 %v446, %v445
        %vm455 = vcmask 523264
        %v457 = vsel %vm455, %v422, 0
        %459 = vmatprep.subr.bf16.mxu0 0
        %460 = vmatpush1.bf16.msra.mxu0 0
        %461 = vmatprep.subr.bf16.mxu0 0
        %462 = vmatpush1.bf16.msra.mxu0 0
        %463 = vmatprep.subr.bf16.mxu0 0
        %464 = vmatpush1.bf16.msra.mxu0 0
        %465 = vmatprep.subr.bf16.mxu0 0
        %466 = vmatpush1.bf16.msra.mxu0 0
        %467 = vmatprep.subr.bf16.mxu0 0
        %468 = vmatpush1.bf16.msra.mxu0 %v450
        %469 = vmatprep.subr.bf16.mxu0 0
        %470 = vmatpush1.bf16.msra.mxu0 %v449
        %471 = vmatprep.subr.bf16.mxu0 0
        %472 = vmatpush1.bf16.msra.mxu0 %v448
        %473 = vmatprep.subr.bf16.mxu0 0
        %474 = vmatpush1.bf16.msra.mxu0 %v447
        %475 = vmatprep.subr.bf16.mxu0 0
        %476 = vmatpush2.bf16.msra.mxu0 0
        %477 = vmatprep.subr.bf16.mxu0 0
        %478 = vmatpush2.bf16.msra.mxu0 0
        %479 = vmatprep.subr.bf16.mxu0 0
        %480 = vmatpush2.bf16.msra.mxu0 0
        %481 = vmatprep.subr.bf16.mxu0 0
        %482 = vmatpush2.bf16.msra.mxu0 0
        %483 = vmatprep.subr.bf16.mxu0 0
        %484 = vmatpush2.bf16.msra.mxu0 0
        %485 = vmatprep.subr.bf16.mxu0 0
        %486 = vmatpush2.bf16.msra.mxu0 0
        %487 = vmatprep.subr.bf16.mxu0 0
        %488 = vmatpush2.bf16.msra.mxu0 0
        %489 = vmatprep.subr.bf16.mxu0 0
        %490 = vmatpush2.bf16.msra.mxu0 0
        %491 = vmatprep.mubr.bf16.mxu0 0
        %492 = vmatmul.mubr.bf16.gmra.mxu0 %v457
        %v493 = vpop.f32.mrf.mxu0
        %v494 = vadd.f32 0.0, %v493
        %v495 = vpop.f32.mrf.mxu0
        %v496 = vpop.f32.mrf.mxu0
        %v497 = vpop.f32.mrf.mxu0
        %498 = vdwg.mxu0
        %vm499 = vcmask 519168
        %500 = vst.msk [vmem:[%s219] sm:$0xf] %vm499, %v494
        %s501 = scalar_lea.vmem %s195, 4 [#allocation4]
        %v502 = vld [vmem:[%s501] sm:$0xf]
        %503 = vxpose.xlu0.b32.start [1/16] %v502, 128
        %504 = vxpose.xlu0.b32.cont [2/16] 0.0, 128
        %505 = vxpose.xlu0.b32.cont [3/16] 0.0, 128
        %506 = vxpose.xlu0.b32.cont [4/16] 0.0, 128
        %507 = vxpose.xlu0.b32.cont [5/16] 0.0, 128
        %508 = vxpose.xlu0.b32.cont [6/16] 0.0, 128
        %509 = vxpose.xlu0.b32.cont [7/16] 0.0, 128
        %510 = vxpose.xlu0.b32.cont [8/16] 0.0, 128
        %511 = vxpose.xlu0.b32.cont [9/16] 0.0, 128
        %512 = vxpose.xlu0.b32.cont [10/16] 0.0, 128
        %513 = vxpose.xlu0.b32.cont [11/16] 0.0, 128
        %514 = vxpose.xlu0.b32.cont [12/16] 0.0, 128
        %515 = vxpose.xlu0.b32.cont [13/16] 0.0, 128
        %516 = vxpose.xlu0.b32.cont [14/16] 0.0, 128
        %517 = vxpose.xlu0.b32.cont [15/16] 0.0, 128
        %518 = vxpose.xlu0.b32.end [16/16] 0.0, 128
        %v519 = vpop.trf.xlu0
        %v520 = vpop.trf.xlu0
        %v521 = vpop.trf.xlu0
        %v522 = vpop.trf.xlu0
        %v523 = vpop.trf.xlu0
        %v524 = vpop.trf.xlu0
        %v525 = vpop.trf.xlu0
        %v526 = vpop.trf.xlu0
        %v527 = vpop.trf.xlu0
        %v528 = vpop.trf.xlu0
        %v529 = vpop.trf.xlu0
        %v530 = vpop.trf.xlu0
        %v531 = vpop.trf.xlu0
        %v532 = vpop.trf.xlu0
        %v533 = vpop.trf.xlu0
        %v534 = vpop.trf.xlu0
        %535 = vst.msk [vmem:[#allocation2] sm:$0xff] %vm256, %v519
        %536 = vst.msk [vmem:[#allocation2 + $0x8] sm:$0xff] %vm256, %v520
        %s537 = scalar_lea.vmem %s195, 12 [#allocation4]
        %v538 = vld [vmem:[%s537] sm:$0xf]
        %539 = vxpose.xlu0.b32.start [1/16] %v538, 128
        %540 = vxpose.xlu0.b32.cont [2/16] 0.0, 128
        %541 = vxpose.xlu0.b32.cont [3/16] 0.0, 128
        %542 = vxpose.xlu0.b32.cont [4/16] 0.0, 128
        %543 = vxpose.xlu0.b32.cont [5/16] 0.0, 128
        %544 = vxpose.xlu0.b32.cont [6/16] 0.0, 128
        %545 = vxpose.xlu0.b32.cont [7/16] 0.0, 128
        %546 = vxpose.xlu0.b32.cont [8/16] 0.0, 128
        %547 = vxpose.xlu0.b32.cont [9/16] 0.0, 128
        %548 = vxpose.xlu0.b32.cont [10/16] 0.0, 128
        %549 = vxpose.xlu0.b32.cont [11/16] 0.0, 128
        %550 = vxpose.xlu0.b32.cont [12/16] 0.0, 128
        %551 = vxpose.xlu0.b32.cont [13/16] 0.0, 128
        %552 = vxpose.xlu0.b32.cont [14/16] 0.0, 128
        %553 = vxpose.xlu0.b32.cont [15/16] 0.0, 128
        %554 = vxpose.xlu0.b32.end [16/16] 0.0, 128
        %v555 = vpop.trf.xlu0
        %v556 = vpop.trf.xlu0
        %v557 = vpop.trf.xlu0
        %v558 = vpop.trf.xlu0
        %v559 = vpop.trf.xlu0
        %v560 = vpop.trf.xlu0
        %v561 = vpop.trf.xlu0
        %v562 = vpop.trf.xlu0
        %v563 = vpop.trf.xlu0
        %v564 = vpop.trf.xlu0
        %v565 = vpop.trf.xlu0
        %v566 = vpop.trf.xlu0
        %v567 = vpop.trf.xlu0
        %v568 = vpop.trf.xlu0
        %v569 = vpop.trf.xlu0
        %v570 = vpop.trf.xlu0
        %573 = vrot.lane.b32.xlu0 %v555, 4
        %v574 = vpop.permute.xlu0 %573
        %575 = vrot.lane.b32.xlu0 %v556, 4
        %v576 = vpop.permute.xlu0 %575
        %579 = vst.msk [vmem:[#allocation2] sm:$0xff] %vm301, %v574
        %580 = vst.msk [vmem:[#allocation2 + $0x8] sm:$0xff] %vm301, %v576
        %s581 = scalar_lea.vmem %s195, 20 [#allocation4]
        %v582 = vld [vmem:[%s581] sm:$0xf]
        %583 = vxpose.xlu0.b32.start [1/16] %v582, 128
        %584 = vxpose.xlu0.b32.cont [2/16] 0.0, 128
        %585 = vxpose.xlu0.b32.cont [3/16] 0.0, 128
        %586 = vxpose.xlu0.b32.cont [4/16] 0.0, 128
        %587 = vxpose.xlu0.b32.cont [5/16] 0.0, 128
        %588 = vxpose.xlu0.b32.cont [6/16] 0.0, 128
        %589 = vxpose.xlu0.b32.cont [7/16] 0.0, 128
        %590 = vxpose.xlu0.b32.cont [8/16] 0.0, 128
        %591 = vxpose.xlu0.b32.cont [9/16] 0.0, 128
        %592 = vxpose.xlu0.b32.cont [10/16] 0.0, 128
        %593 = vxpose.xlu0.b32.cont [11/16] 0.0, 128
        %594 = vxpose.xlu0.b32.cont [12/16] 0.0, 128
        %595 = vxpose.xlu0.b32.cont [13/16] 0.0, 128
        %596 = vxpose.xlu0.b32.cont [14/16] 0.0, 128
        %597 = vxpose.xlu0.b32.cont [15/16] 0.0, 128
        %598 = vxpose.xlu0.b32.end [16/16] 0.0, 128
        %v599 = vpop.trf.xlu0
        %v600 = vpop.trf.xlu0
        %v601 = vpop.trf.xlu0
        %v602 = vpop.trf.xlu0
        %v603 = vpop.trf.xlu0
        %v604 = vpop.trf.xlu0
        %v605 = vpop.trf.xlu0
        %v606 = vpop.trf.xlu0
        %v607 = vpop.trf.xlu0
        %v608 = vpop.trf.xlu0
        %v609 = vpop.trf.xlu0
        %v610 = vpop.trf.xlu0
        %v611 = vpop.trf.xlu0
        %v612 = vpop.trf.xlu0
        %v613 = vpop.trf.xlu0
        %v614 = vpop.trf.xlu0
        %617 = vrot.lane.b32.xlu0 %v599, 8
        %v618 = vpop.permute.xlu0 %617
        %619 = vrot.lane.b32.xlu0 %v600, 8
        %v620 = vpop.permute.xlu0 %619
        %623 = vst.msk [vmem:[#allocation2] sm:$0xff] %vm346, %v618
        %624 = vst.msk [vmem:[#allocation2 + $0x8] sm:$0xff] %vm346, %v620
        %s625 = scalar_lea.vmem %s195, 28 [#allocation4]
        %v626 = vld [vmem:[%s625] sm:$0xf]
        %627 = vxpose.xlu0.b32.start [1/16] %v626, 128
        %628 = vxpose.xlu0.b32.cont [2/16] 0.0, 128
        %629 = vxpose.xlu0.b32.cont [3/16] 0.0, 128
        %630 = vxpose.xlu0.b32.cont [4/16] 0.0, 128
        %631 = vxpose.xlu0.b32.cont [5/16] 0.0, 128
        %632 = vxpose.xlu0.b32.cont [6/16] 0.0, 128
        %633 = vxpose.xlu0.b32.cont [7/16] 0.0, 128
        %634 = vxpose.xlu0.b32.cont [8/16] 0.0, 128
        %635 = vxpose.xlu0.b32.cont [9/16] 0.0, 128
        %636 = vxpose.xlu0.b32.cont [10/16] 0.0, 128
        %637 = vxpose.xlu0.b32.cont [11/16] 0.0, 128
        %638 = vxpose.xlu0.b32.cont [12/16] 0.0, 128
        %639 = vxpose.xlu0.b32.cont [13/16] 0.0, 128
        %640 = vxpose.xlu0.b32.cont [14/16] 0.0, 128
        %641 = vxpose.xlu0.b32.cont [15/16] 0.0, 128
        %642 = vxpose.xlu0.b32.end [16/16] 0.0, 128
        %v643 = vpop.trf.xlu0
        %v644 = vpop.trf.xlu0
        %v645 = vpop.trf.xlu0
        %v646 = vpop.trf.xlu0
        %v647 = vpop.trf.xlu0
        %v648 = vpop.trf.xlu0
        %v649 = vpop.trf.xlu0
        %v650 = vpop.trf.xlu0
        %v651 = vpop.trf.xlu0
        %v652 = vpop.trf.xlu0
        %v653 = vpop.trf.xlu0
        %v654 = vpop.trf.xlu0
        %v655 = vpop.trf.xlu0
        %v656 = vpop.trf.xlu0
        %v657 = vpop.trf.xlu0
        %v658 = vpop.trf.xlu0
        %661 = vrot.lane.b32.xlu0 %v643, 12
        %v662 = vpop.permute.xlu0 %661
        %663 = vrot.lane.b32.xlu0 %v644, 12
        %v664 = vpop.permute.xlu0 %663
        %667 = vst.msk [vmem:[#allocation2] sm:$0xff] %vm391, %v662
        %668 = vst.msk [vmem:[#allocation2 + $0x8] sm:$0xff] %vm391, %v664
        %v669 = vld [vmem:[#allocation2] ss:$4 sm:$0xf]
        %670 = vst.msk [vmem:[#allocation3] sm:$0xf] %vm395, %v669
        %v671 = vld [vmem:[%s397] ss:$4 sm:$0xf]
        %673 = vrot.lane.b32.xlu0 %v671, 16
        %v674 = vpop.permute.xlu0 %673
        %676 = vst.msk [vmem:[#allocation3] sm:$0xf] %vm403, %v674
        %v677 = vld [vmem:[%s405] ss:$4 sm:$0xf]
        %679 = vrot.lane.b32.xlu0 %v677, 32
        %v680 = vpop.permute.xlu0 %679
        %682 = vst.msk [vmem:[#allocation3] sm:$0xf] %vm411, %v680
        %v683 = vld [vmem:[%s413] ss:$4 sm:$0xf]
        %685 = vrot.lane.b32.xlu0 %v683, 48
        %v686 = vpop.permute.xlu0 %685
        %688 = vst.msk [vmem:[#allocation3] sm:$0xf] %vm419, %v686
        %v689 = vld [vmem:[#allocation3] sm:$0xf]
        %v690 = vpack.c.bf16 %v689, %v689
        %v691 = vld [vmem:[#allocation7] sm:$0xf]
        %v692 = vld [vmem:[#allocation7 + $0x4] sm:$0xf]
        %v693 = vld [vmem:[#allocation7 + $0x8] sm:$0xf]
        %v694 = vld [vmem:[#allocation7 + $0xc] sm:$0xf]
        %v695 = vld [vmem:[#allocation7 + $0x10] sm:$0xf]
        %v696 = vld [vmem:[#allocation7 + $0x14] sm:$0xf]
        %v697 = vld [vmem:[#allocation7 + $0x18] sm:$0xf]
        %v698 = vld [vmem:[#allocation7 + $0x1c] sm:$0xf]
        %v707 = vunpack.c.l.b16 %v691
        %v708 = vunpack.c.l.b16 %v692
        %v709 = vunpack.c.l.b16 %v693
        %v710 = vunpack.c.l.b16 %v694
        %v711 = vunpack.c.l.b16 %v695
        %v712 = vunpack.c.l.b16 %v696
        %v713 = vunpack.c.l.b16 %v697
        %v714 = vunpack.c.l.b16 %v698
        %v715 = vpack.c.b16 %v708, %v707
        %v716 = vpack.c.b16 %v710, %v709
        %v717 = vpack.c.b16 %v712, %v711
        %v718 = vpack.c.b16 %v714, %v713
        %v724 = vsel %vm455, %v690, 0
        %726 = vmatprep.subr.bf16.mxu0 0
        %727 = vmatpush1.bf16.msra.mxu0 0
        %728 = vmatprep.subr.bf16.mxu0 0
        %729 = vmatpush1.bf16.msra.mxu0 0
        %730 = vmatprep.subr.bf16.mxu0 0
        %731 = vmatpush1.bf16.msra.mxu0 0
        %732 = vmatprep.subr.bf16.mxu0 0
        %733 = vmatpush1.bf16.msra.mxu0 0
        %734 = vmatprep.subr.bf16.mxu0 0
        %735 = vmatpush1.bf16.msra.mxu0 %v718
        %736 = vmatprep.subr.bf16.mxu0 0
        %737 = vmatpush1.bf16.msra.mxu0 %v717
        %738 = vmatprep.subr.bf16.mxu0 0
        %739 = vmatpush1.bf16.msra.mxu0 %v716
        %740 = vmatprep.subr.bf16.mxu0 0
        %741 = vmatpush1.bf16.msra.mxu0 %v715
        %742 = vmatprep.subr.bf16.mxu0 0
        %743 = vmatpush2.bf16.msra.mxu0 0
        %744 = vmatprep.subr.bf16.mxu0 0
        %745 = vmatpush2.bf16.msra.mxu0 0
        %746 = vmatprep.subr.bf16.mxu0 0
        %747 = vmatpush2.bf16.msra.mxu0 0
        %748 = vmatprep.subr.bf16.mxu0 0
        %749 = vmatpush2.bf16.msra.mxu0 0
        %750 = vmatprep.subr.bf16.mxu0 0
        %751 = vmatpush2.bf16.msra.mxu0 0
        %752 = vmatprep.subr.bf16.mxu0 0
        %753 = vmatpush2.bf16.msra.mxu0 0
        %754 = vmatprep.subr.bf16.mxu0 0
        %755 = vmatpush2.bf16.msra.mxu0 0
        %756 = vmatprep.subr.bf16.mxu0 0
        %757 = vmatpush2.bf16.msra.mxu0 0
        %758 = vmatprep.mubr.bf16.mxu0 0
        %759 = vmatmul.mubr.bf16.gmra.mxu0 %v724
        %v760 = vpop.f32.mrf.mxu0
        %v761 = vadd.f32 0.0, %v760
        %v762 = vpop.f32.mrf.mxu0
        %v763 = vpop.f32.mrf.mxu0
        %v764 = vpop.f32.mrf.mxu0
        %765 = vdwg.mxu0
        %s766 = scalar_lea.vmem %s219, 4 [#allocation9]
        %767 = vst.msk [vmem:[%s766] sm:$0xf] %vm499, %v761
        %s768 = sand.u32 %s91, 1
        %s769 = scalar_lea.sflag [#allocation6], %s768
        %s770 = sand.u32 %s91, 1
        %s771 = smul.addr %s770, 8
        %s772 = scalar_lea.vmem [#allocation9], %s771
        // Predicated region
        $region37: #{tpu_custom_call.1} parent=27 // pred_check
          %p773 = pneg %p101
        $region38: #{tpu_custom_call.1} parent=27 // pred_check_branch
          %775 = sbr.rel (%p773) target = $region40
        $region39: #{tpu_custom_call.1} parent=27 // pred_region
          %s776 = smul.u32 2, %s25
          %s778 = ssub.s32 128, 128
          %779 = vsyncadd %s769, %s778
          %s780 = smul.addr %s24, 4
          %s781 = sadd.s32 %s776, %s780
          %s782 = smul.addr %s781, 64
          %s783 = scalar_lea.hbm %s2, %s782
          %s784 = sshll.u32 %s772, 4
          %s785 = int_to_ptr.vmem [resolvable:$true] %s784
          %790 = dma.vmem_to_hbm [thread:$0]  %s785, 128, %s783, %s769, 64, 64, 4
        $region40: #{tpu_custom_call.1} parent=27 // pred_fallthru
          _
      $region28: #{tpu_custom_call.1} parent=5 // pred_fallthru
        _
      %p791 = scmp.le.s32.totalorder 2, %s15
      // Predicated region
      $region41: #{tpu_custom_call.1} parent=5 // pred_check
        %p792 = pneg %p791
      $region42: #{tpu_custom_call.1} parent=5 // pred_check_branch
        %794 = sbr.rel (%p792) target = $region44
      $region43: #{tpu_custom_call.1} parent=5 // pred_region
        %s795 = ssub.s32 %s15, 2
        // Predicated region
        $region45: #{tpu_custom_call.1} parent=43 // pred_check
          %p796 = pneg %p107
        $region46: #{tpu_custom_call.1} parent=43 // pred_check_branch
          %798 = sbr.rel (%p796) target = $region48
        $region47: #{tpu_custom_call.1} parent=43 // pred_region
          %s799 = sand.u32 %s92, 1
          %s800 = scalar_lea.sflag [#allocation6], %s799
          %s801 = sand.u32 %s92, 1
          %s802 = smul.addr %s801, 8
          %s803 = scalar_lea.vmem [#allocation9], %s802
          %804 = dma.done %s800, 128
        $region48: #{tpu_custom_call.1} parent=43 // pred_fallthru
          _
      $region44: #{tpu_custom_call.1} parent=5 // pred_fallthru
        _
    $region6: #{tpu_custom_call.1} parent=1 // loop_footer
      %s19 = sadd.s32 1, %s15
    $region7: #{tpu_custom_call.1} parent=1 // loop_footer_branch
      %14 = sbr.rel target = $region3
    $region8: #{tpu_custom_call.1} parent=1 // loop_exit
      _
    %805 = vsyncpa [#allocation5], 1
    %s806 = scalar_lea.sflag [#allocation5], 1
    %807 = vsyncpa %s806, 1
    %808 = vsyncpa [#allocation8], 1
    %809 = vsyncpa [#allocation6], 1
    %s810 = scalar_lea.sflag [#allocation6], 1
    %811 = vsyncpa %s810, 1

</llo_original>
